<compile_context>
chip_gen: v7x
topology: tpu7x:2x2x1
jax: 0.10.0
libtpu: 0.0.40
codegen_flags: <defaults>
</compile_context>

<pallas_src>
import math

import jax
import jax.numpy as jnp
from jax import lax
from jax.experimental import pallas as pl
from jax.experimental.pallas import tpu as pltpu

_INV_SQRT2 = 1.0 / math.sqrt(2.0)


def _round_up(x, m):
    return (x + m - 1) // m * m


# ----------------------------- Pallas kernel ---------------------------------

def _patch_embed_kernel(p_ref, w1_ref, b1_ref, w2_ref, b2_ref, out_ref):
    """One token row-tile per grid step.

    p_ref:   (TILE_T, Kp) bf16  im2col'd patches (K ordered C, ph, pw; 0-padded)
    w1_ref:  (Kp, Ep)     bf16  conv1 weight in matmul form (0-padded)
    b1_ref:  (1, Ep)      f32
    w2_ref:  (Ep, Op)     bf16  1x1 conv2 weight in matmul form (0-padded)
    b2_ref:  (1, Op)      f32
    out_ref: (TILE_T, Op) f32
    """
    # First conv as matmul: bf16 inputs, f32 accumulation on the MXU.
    h = jnp.dot(p_ref[...], w1_ref[...], preferred_element_type=jnp.float32)
    h = h + b1_ref[...]                               # broadcast (1, Ep), f32
    # Exact GELU (PyTorch nn.GELU default): 0.5 * x * (1 + erf(x / sqrt(2))).
    h = 0.5 * h * (1.0 + lax.erf(h * _INV_SQRT2))
    # 1x1 conv as matmul.
    o = jnp.dot(h.astype(w2_ref.dtype), w2_ref[...],
                preferred_element_type=jnp.float32)
    out_ref[...] = (o + b2_ref[...]).astype(out_ref.dtype)


def _pick_tile_t(bt, kp, ep, op, max_tile_t=512, vmem_budget_bytes=40 << 20):
    """Token-tile rows such that double-buffered tiles + resident weights +
    the f32 intermediate fit a conservative VMEM budget (works for v7x's
    64 MiB as well as v5e/v6e 128 MiB)."""
    weight_bytes = 2 * (kp * ep * 2 + ep * op * 2 + (ep + op) * 4)
    # dbl-buffered bf16 input + dbl-buffered f32 output + f32 intermediate h
    per_row = 2 * (kp * 2) + 2 * (op * 4) + ep * 4
    tile = max(8, (vmem_budget_bytes - weight_bytes) // per_row)
    tile = min(max_tile_t, tile)
    # When there is enough work, keep >=2 grid steps so both v7x cores run.
    if bt >= 16 and tile * 2 > bt:
        tile = _round_up(bt, 16) // 2
    tile = max(8, (tile // 8) * 8)
    return min(tile, _round_up(bt, 8))


def patch_embed_pallas(x, w1, b1, w2, b2, patch_size, stride):
    """x: (B, C, H, W) float32.  Returns (B, out_dim, out_h, out_w)."""
    B, C, H, W = x.shape
    ph = pw = patch_size
    sh = sw = stride
    E = w1.shape[0]          # embed_dim
    O = w2.shape[0]          # out_dim
    out_h = (H - ph) // sh + 1
    out_w = (W - pw) // sw + 1
    T = out_h * out_w
    K = C * ph * pw
    BT = B * T

    # ---- glue: vectorized im2col (single gather, K ordered (C, ph, pw)) ----
    row_idx = jnp.arange(out_h)[:, None] * sh + jnp.arange(ph)[None, :]   # (out_h, ph)
    col_idx = jnp.arange(out_w)[:, None] * sw + jnp.arange(pw)[None, :]   # (out_w, pw)
    pat = x[:, :, row_idx]                       # (B, C, out_h, ph, W)
    pat = pat[:, :, :, :, col_idx]               # (B, C, out_h, ph, out_w, pw)
    pat = pat.transpose(0, 2, 4, 1, 3, 5)        # (B, out_h, out_w, C, ph, pw)
    pat = pat.reshape(BT, K)

    # ---- pad to MXU/lane-friendly shapes (zero padding is exact) ----
    Kp = _round_up(K, 128)
    Ep = _round_up(E, 128)
    Op = _round_up(O, 128)
    TILE_T = _pick_tile_t(BT, Kp, Ep, Op)
    BTp = _round_up(BT, TILE_T)

    pat = jnp.pad(pat, ((0, BTp - BT), (0, Kp - K))).astype(jnp.bfloat16)

    w1_mat = jnp.pad(w1.reshape(E, K).T,
                     ((0, Kp - K), (0, Ep - E))).astype(jnp.bfloat16)
    b1_mat = jnp.pad(b1.reshape(1, E),
                     ((0, 0), (0, Ep - E))).astype(jnp.float32)
    w2_mat = jnp.pad(w2.reshape(O, E).T,
                     ((0, Ep - E), (0, Op - O))).astype(jnp.bfloat16)
    b2_mat = jnp.pad(b2.reshape(1, O),
                     ((0, 0), (0, Op - O))).astype(jnp.float32)

    grid = (BTp // TILE_T,)

    cost = pl.CostEstimate(
        flops=2 * BTp * Kp * Ep + 2 * BTp * Ep * Op,
        transcendentals=BTp * Ep,
        bytes_accessed=(BTp * Kp * 2 + Kp * Ep * 2 + Ep * Op * 2
                        + (Ep + Op) * 4 + BTp * Op * 4),
    )

    out = pl.pallas_call(
        _patch_embed_kernel,
        out_shape=jax.ShapeDtypeStruct((BTp, Op), jnp.float32),
        grid_spec=pltpu.PrefetchScalarGridSpec(
            num_scalar_prefetch=0,
            grid=grid,
            in_specs=[
                pl.BlockSpec((TILE_T, Kp), lambda i: (i, 0)),    # token tile
                pl.BlockSpec((Kp, Ep), lambda i: (0, 0)),        # resident w1
                pl.BlockSpec((1, Ep), lambda i: (0, 0)),         # resident b1
                pl.BlockSpec((Ep, Op), lambda i: (0, 0)),        # resident w2
                pl.BlockSpec((1, Op), lambda i: (0, 0)),         # resident b2
            ],
            out_specs=pl.BlockSpec((TILE_T, Op), lambda i: (i, 0)),
        ),
        compiler_params=pltpu.CompilerParams(
            dimension_semantics=("parallel",),
            vmem_limit_bytes=48 * 1024 * 1024,
        ),
        cost_estimate=cost,
    )(pat, w1_mat, b1_mat, w2_mat, b2_mat)

    # Slice off padding, (BT, O) -> (B, out_h, out_w, O) -> NCHW.
    out = out[:BT, :O].astype(x.dtype)
    return out.reshape(B, out_h, out_w, O).transpose(0, 3, 1, 2)


# ------------------------ plain-JAX reference (check) ------------------------

def patch_embed_ref(x, w1, b1, w2, b2, stride):
    y = lax.conv_general_dilated(
        x, w1, window_strides=(stride, stride), padding="VALID",
        dimension_numbers=("NCHW", "OIHW", "NCHW"))
    y = y + b1.reshape(1, -1, 1, 1)
    y = jax.nn.gelu(y, approximate=False)
    z = lax.conv_general_dilated(
        y, w2, window_strides=(1, 1), padding="VALID",
        dimension_numbers=("NCHW", "OIHW", "NCHW"))
    return z + b2.reshape(1, -1, 1, 1)


# ----------------------------------- main -------------------------------------

if __name__ == "__main__":
    # Small config consistent with the module: img=16, patch=8 -> stride=4,
    # out_size = (16 - 8)/4 + 1 = 3.
    B, C, IMG = 2, 4, 16
    PATCH = 8
    STRIDE = PATCH // 2
    EMBED = 32
    OUT_DIM = 16

    key = jax.random.PRNGKey(0)
    kx, kw1, kb1, kw2, kb2 = jax.random.split(key, 5)

    x = jax.random.normal(kx, (B, C, IMG, IMG), dtype=jnp.float32)

    # Deterministic param init (Kaiming-uniform-ish bounds like nn.Conv2d).
    fan1 = C * PATCH * PATCH
    bound1 = 1.0 / math.sqrt(fan1)
    w1 = jax.random.uniform(kw1, (EMBED, C, PATCH, PATCH), jnp.float32,
                            -bound1, bound1)
    b1 = jax.random.uniform(kb1, (EMBED,), jnp.float32, -bound1, bound1)

    fan2 = EMBED
    bound2 = 1.0 / math.sqrt(fan2)
    w2 = jax.random.uniform(kw2, (OUT_DIM, EMBED, 1, 1), jnp.float32,
                            -bound2, bound2)
    b2 = jax.random.uniform(kb2, (OUT_DIM,), jnp.float32, -bound2, bound2)

    out = patch_embed_pallas(x, w1, b1, w2, b2, PATCH, STRIDE)
    out = jax.block_until_ready(out)

    ref = patch_embed_ref(x, w1, b1, w2, b2, STRIDE)
    assert out.shape == ref.shape == (B, OUT_DIM, 3, 3), out.shape
    # bf16 MXU inputs with f32 accumulation -> bf16-level tolerance vs the
    # f32 reference.
    assert jnp.allclose(out, ref, atol=2e-2, rtol=2e-2), \
        float(jnp.max(jnp.abs(out - ref)))

    print("KERNEL_OK")
</pallas_src>

<mosaic_0001>
module attributes {stable_mosaic.version = 11 : i64} {
  func.func @_patch_embed_kernel(%arg0: i32, %arg1: memref<16x256xbf16, #tpu.memory_space<vmem>>, %arg2: memref<256x128xbf16, #tpu.memory_space<vmem>>, %arg3: memref<1x128xf32, #tpu.memory_space<vmem>>, %arg4: memref<128x128xbf16, #tpu.memory_space<vmem>>, %arg5: memref<1x128xf32, #tpu.memory_space<vmem>>, %arg6: memref<16x128xf32, #tpu.memory_space<vmem>>) attributes {dimension_semantics = [#tpu.dimension_semantics<parallel>], iteration_bounds = array<i64: 2>, scalar_prefetch = 0 : i64, scratch_operands = 0 : i64, tpu.core_type = #tpu.core_type<tc>, window_params = [{transform_indices = @transform_0, window_bounds = array<i64: 16, 256>}, {pipeline_mode = #tpu.pipeline_mode<synchronous>, transform_indices = @transform_1, window_bounds = array<i64: 256, 128>}, {pipeline_mode = #tpu.pipeline_mode<synchronous>, transform_indices = @transform_2, window_bounds = array<i64: 1, 128>}, {pipeline_mode = #tpu.pipeline_mode<synchronous>, transform_indices = @transform_3, window_bounds = array<i64: 128, 128>}, {pipeline_mode = #tpu.pipeline_mode<synchronous>, transform_indices = @transform_4, window_bounds = array<i64: 1, 128>}, {transform_indices = @transform_5, window_bounds = array<i64: 16, 128>}]} {
    %c0 = arith.constant 0 : index
    %c0_0 = arith.constant 0 : index
    %0 = vector.load %arg1[%c0, %c0_0] : memref<16x256xbf16, #tpu.memory_space<vmem>>, vector<16x256xbf16>
    %c0_1 = arith.constant 0 : index
    %c0_2 = arith.constant 0 : index
    %1 = vector.load %arg2[%c0_1, %c0_2] : memref<256x128xbf16, #tpu.memory_space<vmem>>, vector<256x128xbf16>
    %cst = arith.constant dense<0.000000e+00> : vector<16x128xf32>
    %2 = tpu.matmul %0, %1, %cst {dimension_numbers = #tpu.dot_dimension_numbers<[1], [0], [0], [1], [0, 0, 1, 1], [], []>} : vector<16x256xbf16>, vector<256x128xbf16>, vector<16x128xf32> -> vector<16x128xf32>
    %c0_3 = arith.constant 0 : index
    %c0_4 = arith.constant 0 : index
    %3 = vector.load %arg3[%c0_3, %c0_4] : memref<1x128xf32, #tpu.memory_space<vmem>>, vector<1x128xf32>
    %4 = vector.broadcast %3 : vector<1x128xf32> to vector<16x128xf32>
    %5 = arith.addf %2, %4 : vector<16x128xf32>
    %cst_5 = arith.constant 5.000000e-01 : f32
    %6 = vector.broadcast %cst_5 : f32 to vector<16x128xf32>
    %7 = arith.mulf %6, %5 : vector<16x128xf32>
    %cst_6 = arith.constant 0.707106769 : f32
    %8 = vector.broadcast %cst_6 : f32 to vector<16x128xf32>
    %9 = arith.mulf %5, %8 : vector<16x128xf32>
    %10 = math.erf %9 : vector<16x128xf32>
    %cst_7 = arith.constant 1.000000e+00 : f32
    %11 = vector.broadcast %cst_7 : f32 to vector<16x128xf32>
    %12 = arith.addf %11, %10 : vector<16x128xf32>
    %13 = arith.mulf %7, %12 : vector<16x128xf32>
    %14 = arith.truncf %13 : vector<16x128xf32> to vector<16x128xbf16>
    %c0_8 = arith.constant 0 : index
    %c0_9 = arith.constant 0 : index
    %15 = vector.load %arg4[%c0_8, %c0_9] : memref<128x128xbf16, #tpu.memory_space<vmem>>, vector<128x128xbf16>
    %cst_10 = arith.constant dense<0.000000e+00> : vector<16x128xf32>
    %16 = tpu.matmul %14, %15, %cst_10 {dimension_numbers = #tpu.dot_dimension_numbers<[1], [0], [0], [1], [0, 0, 1, 1], [], []>} : vector<16x128xbf16>, vector<128x128xbf16>, vector<16x128xf32> -> vector<16x128xf32>
    %c0_11 = arith.constant 0 : index
    %c0_12 = arith.constant 0 : index
    %17 = vector.load %arg5[%c0_11, %c0_12] : memref<1x128xf32, #tpu.memory_space<vmem>>, vector<1x128xf32>
    %18 = vector.broadcast %17 : vector<1x128xf32> to vector<16x128xf32>
    %19 = arith.addf %16, %18 : vector<16x128xf32>
    %c0_13 = arith.constant 0 : index
    %c0_14 = arith.constant 0 : index
    %20 = vector.load %arg6[%c0_13, %c0_14] : memref<16x128xf32, #tpu.memory_space<vmem>>, vector<16x128xf32>
    tpu.vector_store %arg6[%c0_13, %c0_14], %19 {strides = array<i32>} : memref<16x128xf32, #tpu.memory_space<vmem>>, vector<16x128xf32>,
    return
  }
  func.func @transform_0(%arg0: i32) -> (i32, i32) {
    %c0_i32 = arith.constant 0 : i32
    %c0_i32_0 = arith.constant 0 : i32
    return %arg0, %c0_i32 : i32, i32
  }
  func.func @transform_1(%arg0: i32) -> (i32, i32) {
    %c0_i32 = arith.constant 0 : i32
    %c0_i32_0 = arith.constant 0 : i32
    %c0_i32_1 = arith.constant 0 : i32
    return %c0_i32, %c0_i32_0 : i32, i32
  }
  func.func @transform_2(%arg0: i32) -> (i32, i32) {
    %c0_i32 = arith.constant 0 : i32
    %c0_i32_0 = arith.constant 0 : i32
    %c0_i32_1 = arith.constant 0 : i32
    return %c0_i32, %c0_i32_0 : i32, i32
  }
  func.func @transform_3(%arg0: i32) -> (i32, i32) {
    %c0_i32 = arith.constant 0 : i32
    %c0_i32_0 = arith.constant 0 : i32
    %c0_i32_1 = arith.constant 0 : i32
    return %c0_i32, %c0_i32_0 : i32, i32
  }
  func.func @transform_4(%arg0: i32) -> (i32, i32) {
    %c0_i32 = arith.constant 0 : i32
    %c0_i32_0 = arith.constant 0 : i32
    %c0_i32_1 = arith.constant 0 : i32
    return %c0_i32, %c0_i32_0 : i32, i32
  }
  func.func @transform_5(%arg0: i32) -> (i32, i32) {
    %c0_i32 = arith.constant 0 : i32
    %c0_i32_0 = arith.constant 0 : i32
    return %arg0, %c0_i32 : i32, i32
  }
}

</mosaic_0001>

<llo_original>
// kernel: tpu_custom_call.1
$region0: #{tpu_custom_call.1}
  #allocation0 [shape = 'u32[]', space=smem, size = 0x4, offset = 0x4, fixed_abs, tag = 'smem constant byte address 0x4 - core index']
  #allocation1 [shape = 'u32[144,128]{1,0:T(1,128)}', space=vmem, size = 0x12000, scoped, tag = 'internal scratch']
  %s0 = inlined_call_operand.hbm [shape: bf16[32,256], index: 0, kind: input, shape index: {}]
  %s1 = inlined_call_operand.hbm [shape: bf16[256,128], index: 1, kind: input, shape index: {}]
  %s2 = inlined_call_operand.vmem [shape: f32[1,128], index: 2, kind: input, shape index: {}]
  %s3 = inlined_call_operand.hbm [shape: bf16[128,128], index: 3, kind: input, shape index: {}]
  %s4 = inlined_call_operand.vmem [shape: f32[1,128], index: 4, kind: input, shape index: {}]
  %s5 = inlined_call_operand.hbm [shape: f32[32,128], index: 5, kind: output, shape index: {}]
  %s6 = sld [smem:[#allocation0]]
  $region65: #{tpu_custom_call.1} parent=0
    _
  %s8 = ssub.s32 1, %s6
  %s9 = scalar_select 0, %s8, %s6
  $region1: #{tpu_custom_call.1} parent=0
    #allocation2 [shape = 'u8[16384]{0}', space=vmem, size = 0x4000, scoped, tag = 'input window, operand 0']
    #allocation3 [shape = 's32[2]{0}', space=sflag, size = 0x8, scoped, tag = 'scoped memory for tpu_custom_call.1']
    #allocation4 [shape = 's32[2]{0}', space=sflag, size = 0x8, scoped, tag = 'scoped memory for tpu_custom_call.1']
    #allocation5 [shape = 'u8[65536]{0}', space=vmem, size = 0x10000, scoped, tag = 'input window, operand 1, single buffered']
    #allocation6 [shape = 's32[1]{0}', space=sflag, size = 0x4, scoped, tag = 'scoped memory for tpu_custom_call.1']
    #allocation7 [shape = 'u8[32768]{0}', space=vmem, size = 0x8000, scoped, tag = 'input window, operand 3, single buffered']
    #allocation8 [shape = 'u8[16384]{0}', space=vmem, size = 0x4000, scoped, tag = 'output window, operand 0']
    %10 = vsyncpa [#allocation3], 0
    %s11 = scalar_lea.sflag [#allocation3], 1
    %12 = vsyncpa %s11, 0
    %13 = vsyncpa [#allocation6], 0
    %14 = vsyncpa [#allocation4], 0
    %s15 = scalar_lea.sflag [#allocation4], 1
    %16 = vsyncpa %s15, 0
    loop: start=0, step=1, limit=4
    $region2: #{tpu_custom_call.1} parent=1 // loop_pre_header
      _
    $region3: #{tpu_custom_call.1} parent=1 // loop_header
      %s18 = sphi 0, %s22
      %p19 = scmp.ge.s32.totalorder %s18, 4
      %s28 = sphi 0, %s30
      %s31 = sphi 0, %s28
      %s32 = sphi 0, %s31
      %s48 = sphi 0, %s32
      %s52 = sphi 0, %s52
      %s54 = sphi 0, %s52
      %s55 = sphi 0, %s54
      %s69 = sphi 0, %s55
      %s73 = sphi 0, %s73
      %s75 = sphi 0, %s73
      %s76 = sphi 0, %s75
      %s90 = sphi 0, %s76
      %s94 = sphi 0, %s94
      %s96 = sphi 0, %s94
      %s97 = sphi 0, %s96
      %s111 = sphi 0, %s97
      %s115 = sphi 0, %s115
      %s117 = sphi 0, %s115
      %s118 = sphi 0, %s117
      %s132 = sphi 0, %s118
      %s138 = sphi 0, %s140
      %s141 = sphi 0, %s138
      %s142 = sphi 0, %s141
      %s158 = sphi 0, %s142
    $region4: #{tpu_custom_call.1} parent=1 // loop_header_branch
      %21 = sbr.rel (%p19) target = $region8
    $region5: #{tpu_custom_call.1} parent=1 // loop_body
      %s23 = ssub.s32 %s18, 1
      %s24 = ssub.s32 %s18, 2
      %s25 = sadd.s32 %s18, 1
      %s26 = ssub.s32 %s18, %s25
      %p27 = scmp.eq.s32.totalorder %s26, 0
      %s29 = sadd.s32 %s28, 1
      %s30 = scalar_select %p27, %s28, %s29
      %p33 = pneg %p27
      %p34 = scmp.eq.s32.totalorder %s18, 1
      %p35 = por %p33, %p34
      %p36 = scmp.ne.s32.totalorder %s28, %s31
      %p37 = scmp.eq.s32.totalorder %s18, 0
      %p38 = por %p36, %p37
      %p39 = scmp.ne.s32.totalorder %s28, %s31
      %p40 = scmp.eq.s32.totalorder %s23, 1
      %p41 = por %p39, %p40
      %p42 = scmp.ne.s32.totalorder %s31, %s32
      %p43 = scmp.eq.s32.totalorder %s23, 0
      %p44 = por %p42, %p43
      %p45 = scmp.ne.s32.totalorder %s31, %s32
      %p46 = scmp.eq.s32.totalorder %s24, 1
      %p47 = por %p45, %p46
      %p49 = scmp.ne.s32.totalorder %s32, %s48
      %p50 = scmp.eq.s32.totalorder %s24, 0
      %p51 = por %p49, %p50
      %s53 = sadd.s32 %s52, 1
      %p56 = scmp.eq.s32.totalorder %s18, 1
      %p57 = scmp.ne.s32.totalorder %s52, %s54
      %p58 = scmp.eq.s32.totalorder %s18, 0
      %p59 = por %p57, %p58
      %p60 = scmp.ne.s32.totalorder %s52, %s54
      %p61 = scmp.eq.s32.totalorder %s23, 1
      %p62 = por %p60, %p61
      %p63 = scmp.ne.s32.totalorder %s54, %s55
      %p64 = scmp.eq.s32.totalorder %s23, 0
      %p65 = por %p63, %p64
      %p66 = scmp.ne.s32.totalorder %s54, %s55
      %p67 = scmp.eq.s32.totalorder %s24, 1
      %p68 = por %p66, %p67
      %p70 = scmp.ne.s32.totalorder %s55, %s69
      %p71 = scmp.eq.s32.totalorder %s24, 0
      %p72 = por %p70, %p71
      %s74 = sadd.s32 %s73, 1
      %p77 = scmp.eq.s32.totalorder %s18, 1
      %p78 = scmp.ne.s32.totalorder %s73, %s75
      %p79 = scmp.eq.s32.totalorder %s18, 0
      %p80 = por %p78, %p79
      %p81 = scmp.ne.s32.totalorder %s73, %s75
      %p82 = scmp.eq.s32.totalorder %s23, 1
      %p83 = por %p81, %p82
      %p84 = scmp.ne.s32.totalorder %s75, %s76
      %p85 = scmp.eq.s32.totalorder %s23, 0
      %p86 = por %p84, %p85
      %p87 = scmp.ne.s32.totalorder %s75, %s76
      %p88 = scmp.eq.s32.totalorder %s24, 1
      %p89 = por %p87, %p88
      %p91 = scmp.ne.s32.totalorder %s76, %s90
      %p92 = scmp.eq.s32.totalorder %s24, 0
      %p93 = por %p91, %p92
      %s95 = sadd.s32 %s94, 1
      %p98 = scmp.eq.s32.totalorder %s18, 1
      %p99 = scmp.ne.s32.totalorder %s94, %s96
      %p100 = scmp.eq.s32.totalorder %s18, 0
      %p101 = por %p99, %p100
      %p102 = scmp.ne.s32.totalorder %s94, %s96
      %p103 = scmp.eq.s32.totalorder %s23, 1
      %p104 = por %p102, %p103
      %p105 = scmp.ne.s32.totalorder %s96, %s97
      %p106 = scmp.eq.s32.totalorder %s23, 0
      %p107 = por %p105, %p106
      %p108 = scmp.ne.s32.totalorder %s96, %s97
      %p109 = scmp.eq.s32.totalorder %s24, 1
      %p110 = por %p108, %p109
      %p112 = scmp.ne.s32.totalorder %s97, %s111
      %p113 = scmp.eq.s32.totalorder %s24, 0
      %p114 = por %p112, %p113
      %s116 = sadd.s32 %s115, 1
      %p119 = scmp.eq.s32.totalorder %s18, 1
      %p120 = scmp.ne.s32.totalorder %s115, %s117
      %p121 = scmp.eq.s32.totalorder %s18, 0
      %p122 = por %p120, %p121
      %p123 = scmp.ne.s32.totalorder %s115, %s117
      %p124 = scmp.eq.s32.totalorder %s23, 1
      %p125 = por %p123, %p124
      %p126 = scmp.ne.s32.totalorder %s117, %s118
      %p127 = scmp.eq.s32.totalorder %s23, 0
      %p128 = por %p126, %p127
      %p129 = scmp.ne.s32.totalorder %s117, %s118
      %p130 = scmp.eq.s32.totalorder %s24, 1
      %p131 = por %p129, %p130
      %p133 = scmp.ne.s32.totalorder %s118, %s132
      %p134 = scmp.eq.s32.totalorder %s24, 0
      %p135 = por %p133, %p134
      %s136 = ssub.s32 %s18, %s25
      %p137 = scmp.eq.s32.totalorder %s136, 0
      %s139 = sadd.s32 %s138, 1
      %s140 = scalar_select %p137, %s138, %s139
      %p143 = pneg %p137
      %p144 = scmp.eq.s32.totalorder %s18, 1
      %p145 = por %p143, %p144
      %p146 = scmp.ne.s32.totalorder %s138, %s141
      %p147 = scmp.eq.s32.totalorder %s18, 0
      %p148 = por %p146, %p147
      %p149 = scmp.ne.s32.totalorder %s138, %s141
      %p150 = scmp.eq.s32.totalorder %s23, 1
      %p151 = por %p149, %p150
      %p152 = scmp.ne.s32.totalorder %s141, %s142
      %p153 = scmp.eq.s32.totalorder %s23, 0
      %p154 = por %p152, %p153
      %p155 = scmp.ne.s32.totalorder %s141, %s142
      %p156 = scmp.eq.s32.totalorder %s24, 1
      %p157 = por %p155, %p156
      %p159 = scmp.ne.s32.totalorder %s142, %s158
      %p160 = scmp.eq.s32.totalorder %s24, 0
      %p161 = por %p159, %p160
      %p162 = scmp.le.s32.totalorder 1, %s18
      %p163 = scmp.lt.s32.totalorder %s18, 3
      %p164 = pnand %p162, %p163
      %p165 = pneg %p164
      // Predicated region
      $region9: #{tpu_custom_call.1} parent=5 // pred_check
        _
      $region10: #{tpu_custom_call.1} parent=5 // pred_check_branch
        %167 = sbr.rel (%p164) target = $region12
      $region11: #{tpu_custom_call.1} parent=5 // pred_region
        %s168 = ssub.s32 %s18, 1
        // Predicated region
        $region13: #{tpu_custom_call.1} parent=11 // pred_check
          %p169 = pneg %p65
        $region14: #{tpu_custom_call.1} parent=11 // pred_check_branch
          %171 = sbr.rel (%p169) target = $region16
        $region15: #{tpu_custom_call.1} parent=11 // pred_region
          %s173 = ssub.s32 2048, 2048
          %174 = vsyncadd [#allocation6], %s173
          %s175 = sshll.u32 [#allocation5], 4
          %s176 = int_to_ptr.vmem [resolvable:$true] %s175
          %181 = dma.hbm_to_vmem [thread:$0]  %s1, 2048, %s176, [#allocation6], 64, 64, 4
        $region16: #{tpu_custom_call.1} parent=11 // pred_fallthru
          _
        // Predicated region
        $region17: #{tpu_custom_call.1} parent=11 // pred_check
          %p182 = pneg %p86
        $region18: #{tpu_custom_call.1} parent=11 // pred_check_branch
          %184 = sbr.rel (%p182) target = $region20
        $region19: #{tpu_custom_call.1} parent=11 // pred_region
          _
        $region20: #{tpu_custom_call.1} parent=11 // pred_fallthru
          _
        // Predicated region
        $region21: #{tpu_custom_call.1} parent=11 // pred_check
          %p185 = pneg %p107
        $region22: #{tpu_custom_call.1} parent=11 // pred_check_branch
          %187 = sbr.rel (%p185) target = $region24
        $region23: #{tpu_custom_call.1} parent=11 // pred_region
          %s189 = ssub.s32 1024, 1024
          %190 = vsyncadd [#allocation6], %s189
          %s191 = sshll.u32 [#allocation7], 4
          %s192 = int_to_ptr.vmem [resolvable:$true] %s191
          %197 = dma.hbm_to_vmem [thread:$0]  %s3, 1024, %s192, [#allocation6], 64, 64, 4
        $region24: #{tpu_custom_call.1} parent=11 // pred_fallthru
          _
        // Predicated region
        $region25: #{tpu_custom_call.1} parent=11 // pred_check
          %p198 = pneg %p128
        $region26: #{tpu_custom_call.1} parent=11 // pred_check_branch
          %200 = sbr.rel (%p198) target = $region28
        $region27: #{tpu_custom_call.1} parent=11 // pred_region
          _
        $region28: #{tpu_custom_call.1} parent=11 // pred_fallthru
          _
      $region12: #{tpu_custom_call.1} parent=5 // pred_fallthru
        _
      %p201 = scmp.lt.s32.totalorder %s18, 2
      // Predicated region
      $region29: #{tpu_custom_call.1} parent=5 // pred_check
        %p202 = pneg %p201
      $region30: #{tpu_custom_call.1} parent=5 // pred_check_branch
        %204 = sbr.rel (%p202) target = $region32
      $region31: #{tpu_custom_call.1} parent=5 // pred_region
        // Predicated region
        $region33: #{tpu_custom_call.1} parent=31 // pred_check
          %p205 = pneg %p38
        $region34: #{tpu_custom_call.1} parent=31 // pred_check_branch
          %207 = sbr.rel (%p205) target = $region36
        $region35: #{tpu_custom_call.1} parent=31 // pred_region
          %s208 = sand.u32 %s28, 1
          %s209 = scalar_lea.sflag [#allocation3], %s208
          %s210 = sand.u32 %s28, 1
          %s211 = smul.addr %s210, 16
          %s212 = scalar_lea.vmem [#allocation2], %s211
          %s213 = smul.u32 2, %s18
          %s215 = ssub.s32 256, 256
          %216 = vsyncadd %s209, %s215
          %s217 = smul.addr %s213, 2
          %s218 = smul.addr %s217, 64
          %s219 = scalar_lea.hbm %s0, %s218
          %s220 = sshll.u32 %s212, 4
          %s221 = int_to_ptr.vmem [resolvable:$true] %s220
          %226 = dma.hbm_to_vmem [thread:$0]  %s219, 256, %s221, %s209, 128, 128, 8
        $region36: #{tpu_custom_call.1} parent=31 // pred_fallthru
          _
      $region32: #{tpu_custom_call.1} parent=5 // pred_fallthru
        _
      %p227 = scmp.le.s32.totalorder 1, %s18
      %p228 = scmp.lt.s32.totalorder %s18, 3
      %p229 = pnand %p227, %p228
      %p230 = pneg %p229
      // Predicated region
      $region37: #{tpu_custom_call.1} parent=5 // pred_check
        _
      $region38: #{tpu_custom_call.1} parent=5 // pred_check_branch
        %232 = sbr.rel (%p229) target = $region40
      $region39: #{tpu_custom_call.1} parent=5 // pred_region
        %s233 = ssub.s32 %s18, 1
        %s234 = sand.u32 %s31, 1
        %s235 = scalar_lea.sflag [#allocation3], %s234
        %s236 = sand.u32 %s31, 1
        %s237 = smul.addr %s236, 16
        %s238 = scalar_lea.vmem [#allocation2], %s237
        // Predicated region
        $region41: #{tpu_custom_call.1} parent=39 // pred_check
          %p239 = pneg %p44
        $region42: #{tpu_custom_call.1} parent=39 // pred_check_branch
          %241 = sbr.rel (%p239) target = $region44
        $region43: #{tpu_custom_call.1} parent=39 // pred_region
          %242 = dma.done %s235, 256
        $region44: #{tpu_custom_call.1} parent=39 // pred_fallthru
          _
        // Predicated region
        $region45: #{tpu_custom_call.1} parent=39 // pred_check
          %p243 = pneg %p65
        $region46: #{tpu_custom_call.1} parent=39 // pred_check_branch
          %245 = sbr.rel (%p243) target = $region48
        $region47: #{tpu_custom_call.1} parent=39 // pred_region
          %246 = dma.done [#allocation6], 2048
        $region48: #{tpu_custom_call.1} parent=39 // pred_fallthru
          _
        // Predicated region
        $region49: #{tpu_custom_call.1} parent=39 // pred_check
          %p247 = pneg %p107
        $region50: #{tpu_custom_call.1} parent=39 // pred_check_branch
          %249 = sbr.rel (%p247) target = $region52
        $region51: #{tpu_custom_call.1} parent=39 // pred_region
          %250 = dma.done [#allocation6], 1024
        $region52: #{tpu_custom_call.1} parent=39 // pred_fallthru
          _
        %s251 = sand.u32 %s31, 1
        %s252 = scalar_lea.sflag [#allocation3], %s251
        %s253 = sand.u32 %s31, 1
        %s254 = smul.addr %s253, 16
        %s255 = scalar_lea.vmem [#allocation2], %s254
        %p256 = pneg %p44
        %p257 = pneg %p41
        %p258 = pneg %p65
        %p259 = pneg %p62
        %p260 = pneg %p86
        %p261 = pneg %p83
        %p262 = pneg %p107
        %p263 = pneg %p104
        %p264 = pneg %p128
        %p265 = pneg %p125
        %p266 = pneg %p154
        %p267 = pneg %p151
        %s268 = sand.u32 %s141, 1
        %s269 = scalar_lea.sflag [#allocation4], %s268
        %s270 = sand.u32 %s141, 1
        %s271 = smul.addr %s270, 16
        %s272 = scalar_lea.vmem [#allocation8], %s271
        %s273 = smul.u32 2, %s23
        %s274 = smul.u32 2, %s23
        %v276 = vld [vmem:[%s238] sm:$0xff]
        %v277 = vld [vmem:[%s238 + $0x8] sm:$0xff]
        %v278 = vld [vmem:[#allocation5] sm:$0xf]
        %v279 = vld [vmem:[#allocation5 + $0x4] sm:$0xf]
        %v280 = vld [vmem:[#allocation5 + $0x8] sm:$0xf]
        %v281 = vld [vmem:[#allocation5 + $0xc] sm:$0xf]
        %v282 = vld [vmem:[#allocation5 + $0x10] sm:$0xf]
        %v283 = vld [vmem:[#allocation5 + $0x14] sm:$0xf]
        %v284 = vld [vmem:[#allocation5 + $0x18] sm:$0xf]
        %v285 = vld [vmem:[#allocation5 + $0x1c] sm:$0xf]
        %v286 = vld [vmem:[#allocation5 + $0x20] sm:$0xf]
        %v287 = vld [vmem:[#allocation5 + $0x24] sm:$0xf]
        %v288 = vld [vmem:[#allocation5 + $0x28] sm:$0xf]
        %v289 = vld [vmem:[#allocation5 + $0x2c] sm:$0xf]
        %v290 = vld [vmem:[#allocation5 + $0x30] sm:$0xf]
        %v291 = vld [vmem:[#allocation5 + $0x34] sm:$0xf]
        %v292 = vld [vmem:[#allocation5 + $0x38] sm:$0xf]
        %v293 = vld [vmem:[#allocation5 + $0x3c] sm:$0xf]
        %v294 = vld [vmem:[#allocation5 + $0x40] sm:$0xf]
        %v295 = vld [vmem:[#allocation5 + $0x44] sm:$0xf]
        %v296 = vld [vmem:[#allocation5 + $0x48] sm:$0xf]
        %v297 = vld [vmem:[#allocation5 + $0x4c] sm:$0xf]
        %v298 = vld [vmem:[#allocation5 + $0x50] sm:$0xf]
        %v299 = vld [vmem:[#allocation5 + $0x54] sm:$0xf]
        %v300 = vld [vmem:[#allocation5 + $0x58] sm:$0xf]
        %v301 = vld [vmem:[#allocation5 + $0x5c] sm:$0xf]
        %v302 = vld [vmem:[#allocation5 + $0x60] sm:$0xf]
        %v303 = vld [vmem:[#allocation5 + $0x64] sm:$0xf]
        %v304 = vld [vmem:[#allocation5 + $0x68] sm:$0xf]
        %v305 = vld [vmem:[#allocation5 + $0x6c] sm:$0xf]
        %v306 = vld [vmem:[#allocation5 + $0x70] sm:$0xf]
        %v307 = vld [vmem:[#allocation5 + $0x74] sm:$0xf]
        %v308 = vld [vmem:[#allocation5 + $0x78] sm:$0xf]
        %v309 = vld [vmem:[#allocation5 + $0x7c] sm:$0xf]
        %v310 = vld [vmem:[%s2] sm:$0x1]
        %v312 = vlaneseq
        %v313 = vshrl.u32 %v312, 7
        %v314 = vsub.s32 0, %v313
        %v315 = vrot.slane %v310, %v314
        %v319 = vunpack.c.l.b16 %v276
        %v320 = vunpack.c.h.b16 %v276
        %v321 = vunpack.c.l.b16 %v277
        %v322 = vunpack.c.h.b16 %v277
        %v323 = vpack.c.b16 %v321, %v319
        %v324 = vpack.c.b16 %v322, %v320
        %v359 = vunpack.c.l.b16 %v278
        %v360 = vunpack.c.l.b16 %v279
        %v361 = vunpack.c.l.b16 %v280
        %v362 = vunpack.c.l.b16 %v281
        %v363 = vunpack.c.l.b16 %v282
        %v364 = vunpack.c.l.b16 %v283
        %v365 = vunpack.c.l.b16 %v284
        %v366 = vunpack.c.l.b16 %v285
        %v367 = vunpack.c.l.b16 %v286
        %v368 = vunpack.c.l.b16 %v287
        %v369 = vunpack.c.l.b16 %v288
        %v370 = vunpack.c.l.b16 %v289
        %v371 = vunpack.c.l.b16 %v290
        %v372 = vunpack.c.l.b16 %v291
        %v373 = vunpack.c.l.b16 %v292
        %v374 = vunpack.c.l.b16 %v293
        %v375 = vunpack.c.l.b16 %v294
        %v376 = vunpack.c.l.b16 %v295
        %v377 = vunpack.c.l.b16 %v296
        %v378 = vunpack.c.l.b16 %v297
        %v379 = vunpack.c.l.b16 %v298
        %v380 = vunpack.c.l.b16 %v299
        %v381 = vunpack.c.l.b16 %v300
        %v382 = vunpack.c.l.b16 %v301
        %v383 = vunpack.c.l.b16 %v302
        %v384 = vunpack.c.l.b16 %v303
        %v385 = vunpack.c.l.b16 %v304
        %v386 = vunpack.c.l.b16 %v305
        %v387 = vunpack.c.l.b16 %v306
        %v388 = vunpack.c.l.b16 %v307
        %v389 = vunpack.c.l.b16 %v308
        %v390 = vunpack.c.l.b16 %v309
        %v391 = vpack.c.b16 %v360, %v359
        %v392 = vpack.c.b16 %v362, %v361
        %v393 = vpack.c.b16 %v364, %v363
        %v394 = vpack.c.b16 %v366, %v365
        %v395 = vpack.c.b16 %v368, %v367
        %v396 = vpack.c.b16 %v370, %v369
        %v397 = vpack.c.b16 %v372, %v371
        %v398 = vpack.c.b16 %v374, %v373
        %v399 = vpack.c.b16 %v376, %v375
        %v400 = vpack.c.b16 %v378, %v377
        %v401 = vpack.c.b16 %v380, %v379
        %v402 = vpack.c.b16 %v382, %v381
        %v403 = vpack.c.b16 %v384, %v383
        %v404 = vpack.c.b16 %v386, %v385
        %v405 = vpack.c.b16 %v388, %v387
        %v406 = vpack.c.b16 %v390, %v389
        %423 = vmatprep.subr.bf16.mxu0 0
        %424 = vmatpush1.bf16.msra.mxu0 %v391
        %425 = vmatprep.subr.bf16.mxu0 0
        %426 = vmatpush1.bf16.msra.mxu0 %v392
        %427 = vmatprep.subr.bf16.mxu0 0
        %428 = vmatpush1.bf16.msra.mxu0 %v393
        %429 = vmatprep.subr.bf16.mxu0 0
        %430 = vmatpush1.bf16.msra.mxu0 %v394
        %431 = vmatprep.subr.bf16.mxu0 0
        %432 = vmatpush1.bf16.msra.mxu0 %v395
        %433 = vmatprep.subr.bf16.mxu0 0
        %434 = vmatpush1.bf16.msra.mxu0 %v396
        %435 = vmatprep.subr.bf16.mxu0 0
        %436 = vmatpush1.bf16.msra.mxu0 %v397
        %437 = vmatprep.subr.bf16.mxu0 0
        %438 = vmatpush1.bf16.msra.mxu0 %v398
        %439 = vmatprep.subr.bf16.mxu0 0
        %440 = vmatpush1.bf16.msra.mxu0 %v399
        %441 = vmatprep.subr.bf16.mxu0 0
        %442 = vmatpush1.bf16.msra.mxu0 %v400
        %443 = vmatprep.subr.bf16.mxu0 0
        %444 = vmatpush1.bf16.msra.mxu0 %v401
        %445 = vmatprep.subr.bf16.mxu0 0
        %446 = vmatpush1.bf16.msra.mxu0 %v402
        %447 = vmatprep.subr.bf16.mxu0 0
        %448 = vmatpush1.bf16.msra.mxu0 %v403
        %449 = vmatprep.subr.bf16.mxu0 0
        %450 = vmatpush1.bf16.msra.mxu0 %v404
        %451 = vmatprep.subr.bf16.mxu0 0
        %452 = vmatpush1.bf16.msra.mxu0 %v405
        %453 = vmatprep.subr.bf16.mxu0 0
        %454 = vmatpush1.bf16.msra.mxu0 %v406
        %455 = vmatprep.mubr.bf16.mxu0 %v324
        %456 = vmatmul.mubr.bf16.gmra.mrb[0].mxu0 %v323
        %v457 = vpop.f32.mrb[0].mxu0
        %v458 = vadd.f32 %v315, %v457
        %v459 = vpop.f32.mrb[0].mxu0
        %v460 = vpop.f32.mrb[0].mxu0
        %v461 = vadd.f32 %v315, %v460
        %v462 = vpop.f32.mrb[0].mxu0
        %463 = vdwg.mxu0
        %v464 = vmul.f32 %v458, 0.5
        %v465 = vmul.f32 %v461, 0.5
        %v466 = vmul.f32 %v458, 0.70710677
        %v467 = vmul.f32 %v461, 0.70710677
        %v468 = verf.f32.pop %v466
        %v469 = verf.f32.pop %v467
        %v470 = vadd.f32 %v468, 1.0
        %v471 = vadd.f32 %v469, 1.0
        %v472 = vmul.f32 %v464, %v470
        %v473 = vmul.f32 %v465, %v471
        %v474 = vpack.c.bf16 %v473, %v472
        %v475 = vld [vmem:[#allocation7] sm:$0xf]
        %v476 = vld [vmem:[#allocation7 + $0x4] sm:$0xf]
        %v477 = vld [vmem:[#allocation7 + $0x8] sm:$0xf]
        %v478 = vld [vmem:[#allocation7 + $0xc] sm:$0xf]
        %v479 = vld [vmem:[#allocation7 + $0x10] sm:$0xf]
        %v480 = vld [vmem:[#allocation7 + $0x14] sm:$0xf]
        %v481 = vld [vmem:[#allocation7 + $0x18] sm:$0xf]
        %v482 = vld [vmem:[#allocation7 + $0x1c] sm:$0xf]
        %v483 = vld [vmem:[#allocation7 + $0x20] sm:$0xf]
        %v484 = vld [vmem:[#allocation7 + $0x24] sm:$0xf]
        %v485 = vld [vmem:[#allocation7 + $0x28] sm:$0xf]
        %v486 = vld [vmem:[#allocation7 + $0x2c] sm:$0xf]
        %v487 = vld [vmem:[#allocation7 + $0x30] sm:$0xf]
        %v488 = vld [vmem:[#allocation7 + $0x34] sm:$0xf]
        %v489 = vld [vmem:[#allocation7 + $0x38] sm:$0xf]
        %v490 = vld [vmem:[#allocation7 + $0x3c] sm:$0xf]
        %v491 = vld [vmem:[%s4] sm:$0x1]
        %v493 = vlaneseq
        %v494 = vshrl.u32 %v493, 7
        %v495 = vsub.s32 0, %v494
        %v496 = vrot.slane %v491, %v495
        %v514 = vunpack.c.l.b16 %v475
        %v515 = vunpack.c.l.b16 %v476
        %v516 = vunpack.c.l.b16 %v477
        %v517 = vunpack.c.l.b16 %v478
        %v518 = vunpack.c.l.b16 %v479
        %v519 = vunpack.c.l.b16 %v480
        %v520 = vunpack.c.l.b16 %v481
        %v521 = vunpack.c.l.b16 %v482
        %v522 = vunpack.c.l.b16 %v483
        %v523 = vunpack.c.l.b16 %v484
        %v524 = vunpack.c.l.b16 %v485
        %v525 = vunpack.c.l.b16 %v486
        %v526 = vunpack.c.l.b16 %v487
        %v527 = vunpack.c.l.b16 %v488
        %v528 = vunpack.c.l.b16 %v489
        %v529 = vunpack.c.l.b16 %v490
        %v530 = vpack.c.b16 %v515, %v514
        %v531 = vpack.c.b16 %v517, %v516
        %v532 = vpack.c.b16 %v519, %v518
        %v533 = vpack.c.b16 %v521, %v520
        %v534 = vpack.c.b16 %v523, %v522
        %v535 = vpack.c.b16 %v525, %v524
        %v536 = vpack.c.b16 %v527, %v526
        %v537 = vpack.c.b16 %v529, %v528
        %546 = vmatprep.subr.bf16.mxu0 0
        %547 = vmatpush1.bf16.msra.mxu0 %v530
        %548 = vmatprep.subr.bf16.mxu0 0
        %549 = vmatpush1.bf16.msra.mxu0 %v531
        %550 = vmatprep.subr.bf16.mxu0 0
        %551 = vmatpush1.bf16.msra.mxu0 %v532
        %552 = vmatprep.subr.bf16.mxu0 0
        %553 = vmatpush1.bf16.msra.mxu0 %v533
        %554 = vmatprep.subr.bf16.mxu0 0
        %555 = vmatpush1.bf16.msra.mxu0 %v534
        %556 = vmatprep.subr.bf16.mxu0 0
        %557 = vmatpush1.bf16.msra.mxu0 %v535
        %558 = vmatprep.subr.bf16.mxu0 0
        %559 = vmatpush1.bf16.msra.mxu0 %v536
        %560 = vmatprep.subr.bf16.mxu0 0
        %561 = vmatpush1.bf16.msra.mxu0 %v537
        %562 = vmatprep.subr.bf16.mxu0 0
        %563 = vmatpush1.bf16.msra.mxu0 0
        %564 = vmatprep.subr.bf16.mxu0 0
        %565 = vmatpush1.bf16.msra.mxu0 0
        %566 = vmatprep.subr.bf16.mxu0 0
        %567 = vmatpush1.bf16.msra.mxu0 0
        %568 = vmatprep.subr.bf16.mxu0 0
        %569 = vmatpush1.bf16.msra.mxu0 0
        %570 = vmatprep.subr.bf16.mxu0 0
        %571 = vmatpush1.bf16.msra.mxu0 0
        %572 = vmatprep.subr.bf16.mxu0 0
        %573 = vmatpush1.bf16.msra.mxu0 0
        %574 = vmatprep.subr.bf16.mxu0 0
        %575 = vmatpush1.bf16.msra.mxu0 0
        %576 = vmatprep.subr.bf16.mxu0 0
        %577 = vmatpush1.bf16.msra.mxu0 0
        %578 = vmatprep.mubr.bf16.mxu0 0
        %579 = vmatmul.mubr.bf16.gmra.mrb[0].mxu0 %v474
        %v580 = vpop.f32.mrb[0].mxu0
        %v581 = vadd.f32 %v496, %v580
        %v582 = vpop.f32.mrb[0].mxu0
        %v583 = vpop.f32.mrb[0].mxu0
        %v584 = vadd.f32 %v496, %v583
        %v585 = vpop.f32.mrb[0].mxu0
        %586 = vdwg.mxu0
        %587 = vst [vmem:[%s272] sm:$0xff] %v581
        %588 = vst [vmem:[%s272 + $0x8] sm:$0xff] %v584
        %s589 = sand.u32 %s141, 1
        %s590 = scalar_lea.sflag [#allocation4], %s589
        %s591 = sand.u32 %s141, 1
        %s592 = smul.addr %s591, 16
        %s593 = scalar_lea.vmem [#allocation8], %s592
        // Predicated region
        $region53: #{tpu_custom_call.1} parent=39 // pred_check
          %p594 = pneg %p151
        $region54: #{tpu_custom_call.1} parent=39 // pred_check_branch
          %596 = sbr.rel (%p594) target = $region56
        $region55: #{tpu_custom_call.1} parent=39 // pred_region
          %s597 = smul.u32 2, %s23
          %s599 = ssub.s32 256, 256
          %600 = vsyncadd %s590, %s599
          %s601 = smul.addr %s597, 128
          %s602 = scalar_lea.hbm %s5, %s601
          %s603 = sshll.u32 %s593, 4
          %s604 = int_to_ptr.vmem [resolvable:$true] %s603
          %609 = dma.vmem_to_hbm [thread:$0]  %s604, 256, %s602, %s590, 128, 128, 8
        $region56: #{tpu_custom_call.1} parent=39 // pred_fallthru
          _
      $region40: #{tpu_custom_call.1} parent=5 // pred_fallthru
        _
      %p610 = scmp.le.s32.totalorder 2, %s18
      // Predicated region
      $region57: #{tpu_custom_call.1} parent=5 // pred_check
        %p611 = pneg %p610
      $region58: #{tpu_custom_call.1} parent=5 // pred_check_branch
        %613 = sbr.rel (%p611) target = $region60
      $region59: #{tpu_custom_call.1} parent=5 // pred_region
        %s614 = ssub.s32 %s18, 2
        // Predicated region
        $region61: #{tpu_custom_call.1} parent=59 // pred_check
          %p615 = pneg %p157
        $region62: #{tpu_custom_call.1} parent=59 // pred_check_branch
          %617 = sbr.rel (%p615) target = $region64
        $region63: #{tpu_custom_call.1} parent=59 // pred_region
          %s618 = sand.u32 %s142, 1
          %s619 = scalar_lea.sflag [#allocation4], %s618
          %s620 = sand.u32 %s142, 1
          %s621 = smul.addr %s620, 16
          %s622 = scalar_lea.vmem [#allocation8], %s621
          %623 = dma.done %s619, 256
        $region64: #{tpu_custom_call.1} parent=59 // pred_fallthru
          _
      $region60: #{tpu_custom_call.1} parent=5 // pred_fallthru
        _
    $region6: #{tpu_custom_call.1} parent=1 // loop_footer
      %s22 = sadd.s32 1, %s18
    $region7: #{tpu_custom_call.1} parent=1 // loop_footer_branch
      %17 = sbr.rel target = $region3
    $region8: #{tpu_custom_call.1} parent=1 // loop_exit
      _
    %624 = vsyncpa [#allocation3], 1
    %s625 = scalar_lea.sflag [#allocation3], 1
    %626 = vsyncpa %s625, 1
    %627 = vsyncpa [#allocation6], 1
    %628 = vsyncpa [#allocation4], 1
    %s629 = scalar_lea.sflag [#allocation4], 1
    %630 = vsyncpa %s629, 1

</llo_original>
